<compile_context>
chip_gen: v7x
topology: tpu7x:2x2x1
jax: 0.10.0
libtpu: 0.0.40
codegen_flags: <defaults>
</compile_context>

<pallas_src>
import functools
import math

import jax
import jax.numpy as jnp
from jax.experimental import pallas as pl
from jax.experimental.pallas import tpu as pltpu


def _round_up(v, m):
    return -(-v // m) * m


def _cdiv(a, b):
    return -(-a // b)


def _vmem_budget_bytes():
    """Physical VMEM of the local TensorCore (v5e/v6e: 128 MiB, v7x: 64 MiB),
    minus headroom for compiler-internal scratch."""
    cap = 64 * 1024 * 1024                      # conservative default (v7x)
    try:
        cap = int(getattr(pltpu.get_tpu_info(), "vmem_capacity_bytes", cap))
    except Exception:
        pass
    return int(cap * 0.85)


def _oc_pad(oc):
    # Lane-dense output stores.  OC > 128 -> 256-aligned so each pass of the
    # 256-wide v6e/v7x MXU has full column occupancy (256 is a multiple of
    # 128, so v5e is unaffected).
    return 128 if oc <= 128 else _round_up(oc, 256)


# ---------------------------------------------------------------------------
# Path A: small C  --  wrapper-side im2col + one deep MXU dot per tile.
# ---------------------------------------------------------------------------

def _im2col_matmul_kernel(a_ref, w_ref, o_ref):
    # a_ref: (TM, K_pad) im2col patch tile; w_ref: (K_pad, OC_pad) weight;
    # o_ref: (TM, OC_pad).  One deep contraction: the MXU accumulates
    # internally, so there is no f32 accumulator round-trip through VMEM.
    o_ref[...] = jnp.dot(a_ref[...], w_ref[...],
                         preferred_element_type=jnp.float32).astype(o_ref.dtype)


def _conv2d_small_c(x, weight, *, tile_m, compute_dtype):
    B, C, IH, IW = x.shape
    OC, _, KH, KW = weight.shape
    OH, OW = IH - KH + 1, IW - KW + 1
    out_dtype = x.dtype

    M = B * OH * OW                       # exactly the valid output positions
    K = KH * KW * C
    K_pad = _round_up(K, 8)               # sublane-aligned contraction dim
    OC_pad = _oc_pad(OC)

    in_item = jnp.dtype(compute_dtype).itemsize
    out_item = jnp.dtype(out_dtype).itemsize
    align = 16 if in_item == 2 else 8
    budget = _vmem_budget_bytes()

    # Biggest tile that fits VMEM (LHS double-buffered, weight single-buffered,
    # output double-buffered); per-step overhead amortizes over larger tiles.
    TM = min(_round_up(tile_m, align), _round_up(M, align))

    def _est(tm):
        return (2 * tm * K_pad * in_item + K_pad * OC_pad * in_item
                + 2 * tm * OC_pad * out_item)

    while _est(TM) > budget and TM > 2 * align:
        TM = max(align, _round_up(TM // 2, align))
    n_m = _cdiv(M, TM)
    M_pad = n_m * TM

    # Wrapper-side im2col: columns ordered (kh, kw, c) to match the flattened
    # weight.  HBM footprint is only M * KH*KW*C elements (cheap for small C).
    x_nhwc = jnp.transpose(x, (0, 2, 3, 1)).astype(compute_dtype)
    cols = [x_nhwc[:, kh:kh + OH, kw:kw + OW, :]
            for kh in range(KH) for kw in range(KW)]
    patches = jnp.concatenate(cols, axis=-1).reshape(M, K)
    patches = jnp.pad(patches, ((0, M_pad - M), (0, K_pad - K)))

    w_flat = jnp.transpose(weight, (2, 3, 1, 0)).reshape(K, OC)
    w_flat = jnp.pad(w_flat.astype(compute_dtype),
                     ((0, K_pad - K), (0, OC_pad - OC)))

    cost = pl.CostEstimate(
        flops=2 * M * K * OC,
        transcendentals=0,
        bytes_accessed=(M_pad * K_pad + K_pad * OC_pad) * in_item
                        + M_pad * OC_pad * out_item)

    out = pl.pallas_call(
        _im2col_matmul_kernel,
        out_shape=jax.ShapeDtypeStruct((M_pad, OC_pad), out_dtype),
        grid_spec=pltpu.PrefetchScalarGridSpec(
            num_scalar_prefetch=0,
            # One flat parallel axis (B folded into M): balanced across v7x's
            # two TensorCores regardless of batch size.
            grid=(n_m,),
            in_specs=[
                pl.BlockSpec((TM, K_pad), lambda m: (m, 0)),
                # Grid-invariant weight: fetched from HBM once and
                # single-buffered (double buffering a constant block buys
                # nothing and wastes VMEM).
                pl.BlockSpec((K_pad, OC_pad), lambda m: (0, 0),
                             pipeline_mode=pl.Buffered(1)),
            ],
            out_specs=pl.BlockSpec((TM, OC_pad), lambda m: (m, 0)),
        ),
        compiler_params=pltpu.CompilerParams(
            dimension_semantics=("parallel",),
            vmem_limit_bytes=int(min(budget,
                                     max(2 * _est(TM), 32 * 1024 * 1024))),
        ),
        cost_estimate=cost,
    )(patches, w_flat)

    out = out[:M, :OC].reshape(B, OH, OW, OC)
    # NOTE: consumers that accept NHWC could skip this transpose entirely.
    return jnp.transpose(out, (0, 3, 1, 2))


# ---------------------------------------------------------------------------
# Path B: large C  --  fused implicit im2col, image VMEM-resident per batch
# element, one KW*C-deep dot per kernel row kh.
# ---------------------------------------------------------------------------

def _fused_tap_kernel(x_ref, w_ref, o_ref, slab_ref, acc_ref,
                      *, KH, KW, IW, C, n_m):
    # x_ref:    (in_rows, C)      whole zero-halo-padded image of one batch
    #                             element (flattened spatial), VMEM-resident.
    # w_ref:    (KH*KW*C, OC_pad) flattened weight, rows ordered (kh, kw, c).
    # o_ref:    (TM, OC_pad)      output tile (flattened spatial positions).
    # slab_ref: (TM, KW*C)        staged im2col slab for one kernel row.
    # acc_ref:  (TM, OC_pad) f32  accumulator (only KH updates per tile).
    TM = o_ref.shape[0]
    KWC = KW * C
    m0 = pl.multiple_of((pl.program_id(0) % n_m) * TM, TM)
    for kh in range(KH):
        # Stage the kh-shifted rows once, then do a single KW*C-deep MXU
        # contraction (instead of KH*KW shallow C-deep dots).
        for kw in range(KW):
            slab_ref[:, kw * C:(kw + 1) * C] = (
                x_ref[pl.ds(m0 + kh * IW + kw, TM), :])
        d = jnp.dot(slab_ref[...], w_ref[kh * KWC:(kh + 1) * KWC, :],
                    preferred_element_type=jnp.float32)
        if kh == 0:
            acc_ref[...] = d
        else:
            acc_ref[...] += d
    o_ref[...] = acc_ref[...].astype(o_ref.dtype)


def _conv2d_large_c(x, weight, *, tile_m, compute_dtype):
    B, C, IH, IW = x.shape
    OC, _, KH, KW = weight.shape
    OH, OW = IH - KH + 1, IW - KW + 1
    out_dtype = x.dtype

    # "Full-width" formulation: one output row per *input* spatial position;
    # rows with ow >= OW / oh >= OH are junk and sliced away in the wrapper.
    M_img = IH * IW
    halo = (KH - 1) * IW + (KW - 1)
    OC_pad = _oc_pad(OC)

    in_item = jnp.dtype(compute_dtype).itemsize
    out_item = jnp.dtype(out_dtype).itemsize
    align = 16 if in_item == 2 else 8
    budget = _vmem_budget_bytes()
    w_bytes = KH * KW * C * OC_pad * in_item          # single-buffered weight

    def _plan(tm, img_bufs):
        tm = min(_round_up(tm, align), _round_up(M_img, align))
        n_m = _cdiv(M_img, tm)
        m_pad = n_m * tm
        in_rows = m_pad + halo
        est = (img_bufs * in_rows * C * in_item + w_bytes
               + tm * KW * C * in_item                # slab scratch
               + tm * OC_pad * 4                      # f32 accumulator
               + 2 * tm * OC_pad * out_item)          # output double buffer
        return tm, n_m, m_pad, in_rows, est

    # Prefer a double-buffered resident image (overlaps the next batch
    # element's DMA); drop to single buffering, then shrink TM, to fit the
    # local VMEM budget (this is what matters on v7x's 64 MiB).
    req_tm, img_bufs = tile_m, 2
    TM, n_m, M_pad, in_rows, est = _plan(req_tm, img_bufs)
    if est > budget:
        img_bufs = 1
        TM, n_m, M_pad, in_rows, est = _plan(req_tm, img_bufs)
    while est > budget and req_tm > 2 * align:
        req_tm //= 2
        TM, n_m, M_pad, in_rows, est = _plan(req_tm, img_bufs)

    # NCHW -> (B, IH*IW, C) with a zero halo so all shifted reads stay in
    # bounds.  This is the only wrapper-side copy (no im2col blow-up in HBM).
    x_flat = jnp.transpose(x, (0, 2, 3, 1)).reshape(B, M_img, C)
    x_flat = jnp.pad(x_flat.astype(compute_dtype),
                     ((0, 0), (0, in_rows - M_img), (0, 0)))

    w_flat = jnp.transpose(weight, (2, 3, 1, 0)).reshape(KH * KW * C, OC)
    w_flat = jnp.pad(w_flat.astype(compute_dtype), ((0, 0), (0, OC_pad - OC)))

    cost = pl.CostEstimate(
        flops=2 * B * M_pad * KH * KW * C * OC,
        transcendentals=0,
        bytes_accessed=(B * in_rows * C + KH * KW * C * OC_pad) * in_item
                        + B * M_pad * OC_pad * out_item)

    kernel = functools.partial(_fused_tap_kernel,
                               KH=KH, KW=KW, IW=IW, C=C, n_m=n_m)

    out = pl.pallas_call(
        kernel,
        out_shape=jax.ShapeDtypeStruct((B, M_pad, OC_pad), out_dtype),
        grid_spec=pltpu.PrefetchScalarGridSpec(
            num_scalar_prefetch=0,
            # Single flat parallel axis (batch folded in) => even megacore
            # split on v7x even for B == 1 or odd B.
            grid=(B * n_m,),
            in_specs=[
                # Whole padded image of batch element i // n_m: block index is
                # constant across its m-tiles, so it is DMA'd from HBM once per
                # batch element and stays resident.  Falls back to a single
                # buffer when two copies would not fit VMEM.
                pl.BlockSpec((None, in_rows, C),
                             lambda i: (i // n_m, 0, 0),
                             pipeline_mode=(None if img_bufs == 2
                                            else pl.Buffered(1))),
                # Grid-invariant weight: fetched once, single-buffered.
                pl.BlockSpec((KH * KW * C, OC_pad), lambda i: (0, 0),
                             pipeline_mode=pl.Buffered(1)),
            ],
            out_specs=pl.BlockSpec((None, TM, OC_pad),
                                   lambda i: (i // n_m, i % n_m, 0)),
            scratch_shapes=[
                pltpu.VMEM((TM, KW * C), compute_dtype),
                pltpu.VMEM((TM, OC_pad), jnp.float32),
            ],
        ),
        compiler_params=pltpu.CompilerParams(
            dimension_semantics=("parallel",),
            vmem_limit_bytes=int(min(budget,
                                     max(est + est // 2, 32 * 1024 * 1024))),
        ),
        cost_estimate=cost,
    )(x_flat, w_flat)

    # Keep only valid spatial positions / channels, then NHWC -> NCHW.
    out = out[:, :M_img, :OC].reshape(B, IH, IW, OC)[:, :OH, :OW, :]
    return jnp.transpose(out, (0, 3, 1, 2))


# ---------------------------------------------------------------------------
# Public entry point (matches Model.forward semantics).
# ---------------------------------------------------------------------------

def conv2d_pallas(x, weight, *, tile_m=512, compute_dtype=None):
    """2-D convolution: stride 1, VALID padding, dilation 1, groups 1, no bias.

    x: (B, C, IH, IW), weight: (OC, C, KH, KW)  ->  (B, OC, OH, OW)

    compute_dtype=jnp.bfloat16 feeds the v6e/v7x MXU at full rate (f32
    accumulation); default keeps the caller's dtype for exact f32 numerics.
    """
    B, C, IH, IW = x.shape
    OC, Cw, KH, KW = weight.shape
    assert C == Cw, "Input channel count mismatch!"
    assert IH >= KH and IW >= KW
    if compute_dtype is None:
        compute_dtype = x.dtype
    if C < 64:
        return _conv2d_small_c(x, weight, tile_m=tile_m,
                               compute_dtype=compute_dtype)
    return _conv2d_large_c(x, weight, tile_m=tile_m,
                           compute_dtype=compute_dtype)


if __name__ == "__main__":
    key = jax.random.PRNGKey(0)

    def _make(B, C, OC, IH, IW, KH, KW, k):
        kx, kw_key = jax.random.split(k)
        x = jax.random.normal(kx, (B, C, IH, IW), dtype=jnp.float32)
        # Deterministic kaiming_uniform_(a=sqrt(5)) style init.
        bound = 1.0 / math.sqrt(C * KH * KW)
        w = jax.random.uniform(kw_key, (OC, C, KH, KW), dtype=jnp.float32,
                               minval=-bound, maxval=bound)
        return x, w

    def _ref(x, w):
        return jax.lax.conv_general_dilated(
            x, w, window_strides=(1, 1), padding="VALID",
            dimension_numbers=("NCHW", "OIHW", "NCHW"),
            precision=jax.lax.Precision.HIGHEST)

    conv = jax.jit(conv2d_pallas)

    # Test 1: small-C path (the module's representative small shapes).
    k1, k2 = jax.random.split(key)
    x1, w1 = _make(2, 4, 8, 16, 16, 3, 3, k1)
    out1 = jax.block_until_ready(conv(x1, w1))
    ref1 = _ref(x1, w1)
    assert out1.shape == ref1.shape == (2, 8, 14, 14)
    assert jnp.allclose(out1, ref1, atol=1e-2, rtol=1e-2), \
        float(jnp.max(jnp.abs(out1 - ref1)))

    # Test 2: large-C fused-tap path (image-resident, kh-slab staging).
    x2, w2 = _make(2, 64, 32, 12, 12, 3, 3, k2)
    out2 = jax.block_until_ready(conv(x2, w2))
    ref2 = _ref(x2, w2)
    assert out2.shape == ref2.shape == (2, 32, 10, 10)
    assert jnp.allclose(out2, ref2, atol=1e-2, rtol=1e-2), \
        float(jnp.max(jnp.abs(out2 - ref2)))

    print("KERNEL_OK")
</pallas_src>

<mosaic_0001>
module attributes {stable_mosaic.version = 11 : i64} {
  func.func @_im2col_matmul_kernel(%arg0: i32, %arg1: memref<392x40xf32, #tpu.memory_space<vmem>>, %arg2: memref<40x128xf32, #tpu.memory_space<vmem>>, %arg3: memref<392x128xf32, #tpu.memory_space<vmem>>) attributes {dimension_semantics = [#tpu.dimension_semantics<parallel>], iteration_bounds = array<i64: 1>, scalar_prefetch = 0 : i64, scratch_operands = 0 : i64, tpu.core_type = #tpu.core_type<tc>, window_params = [{transform_indices = @transform_0, window_bounds = array<i64: 392, 40>}, {pipeline_mode = #tpu.pipeline_mode<synchronous>, transform_indices = @transform_1, window_bounds = array<i64: 40, 128>}, {transform_indices = @transform_2, window_bounds = array<i64: 392, 128>}]} {
    %c0 = arith.constant 0 : index
    %c0_0 = arith.constant 0 : index
    %0 = vector.load %arg1[%c0, %c0_0] : memref<392x40xf32, #tpu.memory_space<vmem>>, vector<392x40xf32>
    %c0_1 = arith.constant 0 : index
    %c0_2 = arith.constant 0 : index
    %1 = vector.load %arg2[%c0_1, %c0_2] : memref<40x128xf32, #tpu.memory_space<vmem>>, vector<40x128xf32>
    %cst = arith.constant dense<0.000000e+00> : vector<392x128xf32>
    %2 = tpu.matmul %0, %1, %cst {dimension_numbers = #tpu.dot_dimension_numbers<[1], [0], [0], [1], [0, 0, 1, 1], [], []>} : vector<392x40xf32>, vector<40x128xf32>, vector<392x128xf32> -> vector<392x128xf32>
    %c0_3 = arith.constant 0 : index
    %c0_4 = arith.constant 0 : index
    %3 = vector.load %arg3[%c0_3, %c0_4] : memref<392x128xf32, #tpu.memory_space<vmem>>, vector<392x128xf32>
    tpu.vector_store %arg3[%c0_3, %c0_4], %2 {strides = array<i32>} : memref<392x128xf32, #tpu.memory_space<vmem>>, vector<392x128xf32>,
    return
  }
  func.func @transform_0(%arg0: i32) -> (i32, i32) {
    %c0_i32 = arith.constant 0 : i32
    %c0_i32_0 = arith.constant 0 : i32
    return %arg0, %c0_i32 : i32, i32
  }
  func.func @transform_1(%arg0: i32) -> (i32, i32) {
    %c0_i32 = arith.constant 0 : i32
    %c0_i32_0 = arith.constant 0 : i32
    %c0_i32_1 = arith.constant 0 : i32
    return %c0_i32, %c0_i32_0 : i32, i32
  }
  func.func @transform_2(%arg0: i32) -> (i32, i32) {
    %c0_i32 = arith.constant 0 : i32
    %c0_i32_0 = arith.constant 0 : i32
    return %arg0, %c0_i32 : i32, i32
  }
}

</mosaic_0001>

<llo_original>
// kernel: conv2d_pallas.1
$region0: #{conv2d_pallas.1}
  #allocation0 [shape = 'u32[]', space=smem, size = 0x4, offset = 0x4, fixed_abs, tag = 'smem constant byte address 0x4 - core index']
  #allocation1 [shape = 'u32[144,128]{1,0:T(1,128)}', space=vmem, size = 0x12000, scoped, tag = 'internal scratch']
  %s0 = inlined_call_operand.vmem [shape: f32[392,40], index: 0, kind: input, shape index: {}]
  %s1 = inlined_call_operand.vmem [shape: f32[40,128], index: 1, kind: input, shape index: {}]
  %s2 = inlined_call_operand.vmem [shape: f32[392,128], index: 2, kind: output, shape index: {}]
  %s3 = sld [smem:[#allocation0]]
  $region18: #{conv2d_pallas.1} parent=0
    _
  %s5 = ssub.s32 1, %s3
  %s6 = scalar_select 0, %s5, %s3
  // Predicated region
  $region2: #{conv2d_pallas.1} parent=0 // pred_check
    _
  $region3: #{conv2d_pallas.1} parent=0 // pred_check_branch
    %8 = sbr.rel (0) target = $region5
  $region4: #{conv2d_pallas.1} parent=0 // pred_region
    _
  $region5: #{conv2d_pallas.1} parent=0 // pred_fallthru
    _
  // Predicated region
  $region6: #{conv2d_pallas.1} parent=0 // pred_check
    _
  $region7: #{conv2d_pallas.1} parent=0 // pred_check_branch
    %10 = sbr.rel (0) target = $region9
  $region8: #{conv2d_pallas.1} parent=0 // pred_region
    _
  $region9: #{conv2d_pallas.1} parent=0 // pred_fallthru
    _
  %v11 = vld [vmem:[%s0] sm:$0xff]
  %v12 = vld [vmem:[%s0 + $0x8] sm:$0xff]
  %v13 = vld [vmem:[%s0 + $0x10] sm:$0xff]
  %v14 = vld [vmem:[%s0 + $0x18] sm:$0xff]
  %v15 = vld [vmem:[%s0 + $0x20] sm:$0xff]
  %v16 = vld [vmem:[%s0 + $0x28] sm:$0xff]
  %v17 = vld [vmem:[%s0 + $0x30] sm:$0xff]
  %v18 = vld [vmem:[%s0 + $0x38] sm:$0xff]
  %v19 = vld [vmem:[%s0 + $0x40] sm:$0xff]
  %v20 = vld [vmem:[%s0 + $0x48] sm:$0xff]
  %v21 = vld [vmem:[%s0 + $0x50] sm:$0xff]
  %v22 = vld [vmem:[%s0 + $0x58] sm:$0xff]
  %v23 = vld [vmem:[%s0 + $0x60] sm:$0xff]
  %v24 = vld [vmem:[%s0 + $0x68] sm:$0xff]
  %v25 = vld [vmem:[%s0 + $0x70] sm:$0xff]
  %v26 = vld [vmem:[%s0 + $0x78] sm:$0xff]
  %v27 = vld [vmem:[%s0 + $0x80] sm:$0xff]
  %v28 = vld [vmem:[%s0 + $0x88] sm:$0xff]
  %v29 = vld [vmem:[%s0 + $0x90] sm:$0xff]
  %v30 = vld [vmem:[%s0 + $0x98] sm:$0xff]
  %v31 = vld [vmem:[%s0 + $0xa0] sm:$0xff]
  %v32 = vld [vmem:[%s0 + $0xa8] sm:$0xff]
  %v33 = vld [vmem:[%s0 + $0xb0] sm:$0xff]
  %v34 = vld [vmem:[%s0 + $0xb8] sm:$0xff]
  %v35 = vld [vmem:[%s0 + $0xc0] sm:$0xff]
  %v36 = vld [vmem:[%s0 + $0xc8] sm:$0xff]
  %v37 = vld [vmem:[%s0 + $0xd0] sm:$0xff]
  %v38 = vld [vmem:[%s0 + $0xd8] sm:$0xff]
  %v39 = vld [vmem:[%s0 + $0xe0] sm:$0xff]
  %v40 = vld [vmem:[%s0 + $0xe8] sm:$0xff]
  %v41 = vld [vmem:[%s0 + $0xf0] sm:$0xff]
  %v42 = vld [vmem:[%s0 + $0xf8] sm:$0xff]
  %v43 = vld [vmem:[%s0 + $0x100] sm:$0xff]
  %v44 = vld [vmem:[%s0 + $0x108] sm:$0xff]
  %v45 = vld [vmem:[%s0 + $0x110] sm:$0xff]
  %v46 = vld [vmem:[%s0 + $0x118] sm:$0xff]
  %v47 = vld [vmem:[%s0 + $0x120] sm:$0xff]
  %v48 = vld [vmem:[%s0 + $0x128] sm:$0xff]
  %v49 = vld [vmem:[%s0 + $0x130] sm:$0xff]
  %v50 = vld [vmem:[%s0 + $0x138] sm:$0xff]
  %v51 = vld [vmem:[%s0 + $0x140] sm:$0xff]
  %v52 = vld [vmem:[%s0 + $0x148] sm:$0xff]
  %v53 = vld [vmem:[%s0 + $0x150] sm:$0xff]
  %v54 = vld [vmem:[%s0 + $0x158] sm:$0xff]
  %v55 = vld [vmem:[%s0 + $0x160] sm:$0xff]
  %v56 = vld [vmem:[%s0 + $0x168] sm:$0xff]
  %v57 = vld [vmem:[%s0 + $0x170] sm:$0xff]
  %v58 = vld [vmem:[%s0 + $0x178] sm:$0xff]
  %v59 = vld [vmem:[%s0 + $0x180] sm:$0xff]
  %v60 = vld [vmem:[%s1] sm:$0xff]
  %v61 = vld [vmem:[%s1 + $0x8] sm:$0xff]
  %v62 = vld [vmem:[%s1 + $0x10] sm:$0xff]
  %v63 = vld [vmem:[%s1 + $0x18] sm:$0xff]
  %v64 = vld [vmem:[%s1 + $0x20] sm:$0xff]
  %vm65 = vcmask 326656
  %v67 = vsel %vm65, %v11, 0
  %v70 = vsel %vm65, %v12, 0
  %v73 = vsel %vm65, %v13, 0
  %v76 = vsel %vm65, %v14, 0
  %v79 = vsel %vm65, %v15, 0
  %v82 = vsel %vm65, %v16, 0
  %v85 = vsel %vm65, %v17, 0
  %v88 = vsel %vm65, %v18, 0
  %v91 = vsel %vm65, %v19, 0
  %v94 = vsel %vm65, %v20, 0
  %v97 = vsel %vm65, %v21, 0
  %v100 = vsel %vm65, %v22, 0
  %v103 = vsel %vm65, %v23, 0
  %v106 = vsel %vm65, %v24, 0
  %v109 = vsel %vm65, %v25, 0
  %v112 = vsel %vm65, %v26, 0
  %v115 = vsel %vm65, %v27, 0
  %v118 = vsel %vm65, %v28, 0
  %v121 = vsel %vm65, %v29, 0
  %v124 = vsel %vm65, %v30, 0
  %v127 = vsel %vm65, %v31, 0
  %v130 = vsel %vm65, %v32, 0
  %v133 = vsel %vm65, %v33, 0
  %v136 = vsel %vm65, %v34, 0
  %v139 = vsel %vm65, %v35, 0
  %v142 = vsel %vm65, %v36, 0
  %v145 = vsel %vm65, %v37, 0
  %v148 = vsel %vm65, %v38, 0
  %v151 = vsel %vm65, %v39, 0
  %v154 = vsel %vm65, %v40, 0
  %v157 = vsel %vm65, %v41, 0
  %v160 = vsel %vm65, %v42, 0
  %v163 = vsel %vm65, %v43, 0
  %v166 = vsel %vm65, %v44, 0
  %v169 = vsel %vm65, %v45, 0
  %v172 = vsel %vm65, %v46, 0
  %v175 = vsel %vm65, %v47, 0
  %v178 = vsel %vm65, %v48, 0
  %v181 = vsel %vm65, %v49, 0
  %v184 = vsel %vm65, %v50, 0
  %v187 = vsel %vm65, %v51, 0
  %v190 = vsel %vm65, %v52, 0
  %v193 = vsel %vm65, %v53, 0
  %v196 = vsel %vm65, %v54, 0
  %v199 = vsel %vm65, %v55, 0
  %v202 = vsel %vm65, %v56, 0
  %v205 = vsel %vm65, %v57, 0
  %v208 = vsel %vm65, %v58, 0
  %v211 = vsel %vm65, %v59, 0
  %213 = vmatprep.subr.mxu0 0.0
  %214 = vmatpush1.msra.mxu0 %v60
  %215 = vmatprep.subr.mxu0 0.0
  %216 = vmatpush1.msra.mxu0 %v61
  %217 = vmatprep.subr.mxu0 0.0
  %218 = vmatpush1.msra.mxu0 %v62
  %219 = vmatprep.subr.mxu0 0.0
  %220 = vmatpush1.msra.mxu0 %v63
  %221 = vmatprep.subr.mxu0 0.0
  %222 = vmatpush1.msra.mxu0 %v64
  %223 = vmatprep.subr.mxu0 0.0
  %224 = vmatpush1.msra.mxu0 0.0
  %225 = vmatprep.subr.mxu0 0.0
  %226 = vmatpush1.msra.mxu0 0.0
  %227 = vmatprep.subr.mxu0 0.0
  %228 = vmatpush1.msra.mxu0 0.0
  %229 = vmatprep.subr.mxu0 0.0
  %230 = vmatpush1.msra.mxu0 0.0
  %231 = vmatprep.subr.mxu0 0.0
  %232 = vmatpush1.msra.mxu0 0.0
  %233 = vmatprep.subr.mxu0 0.0
  %234 = vmatpush1.msra.mxu0 0.0
  %235 = vmatprep.subr.mxu0 0.0
  %236 = vmatpush1.msra.mxu0 0.0
  %237 = vmatprep.subr.mxu0 0.0
  %238 = vmatpush1.msra.mxu0 0.0
  %239 = vmatprep.subr.mxu0 0.0
  %240 = vmatpush1.msra.mxu0 0.0
  %241 = vmatprep.subr.mxu0 0.0
  %242 = vmatpush1.msra.mxu0 0.0
  %243 = vmatprep.subr.mxu0 0.0
  %244 = vmatpush1.msra.mxu0 0.0
  %245 = vmatprep.subr.mxu0 0.0
  %246 = vmatpush1.msra.mxu0 0.0
  %247 = vmatprep.subr.mxu0 0.0
  %248 = vmatpush1.msra.mxu0 0.0
  %249 = vmatprep.subr.mxu0 0.0
  %250 = vmatpush1.msra.mxu0 0.0
  %251 = vmatprep.subr.mxu0 0.0
  %252 = vmatpush1.msra.mxu0 0.0
  %253 = vmatprep.subr.mxu0 0.0
  %254 = vmatpush1.msra.mxu0 0.0
  %255 = vmatprep.subr.mxu0 0.0
  %256 = vmatpush1.msra.mxu0 0.0
  %257 = vmatprep.subr.mxu0 0.0
  %258 = vmatpush1.msra.mxu0 0.0
  %259 = vmatprep.subr.mxu0 0.0
  %260 = vmatpush1.msra.mxu0 0.0
  %261 = vmatprep.subr.mxu0 0.0
  %262 = vmatpush1.msra.mxu0 0.0
  %263 = vmatprep.subr.mxu0 0.0
  %264 = vmatpush1.msra.mxu0 0.0
  %265 = vmatprep.subr.mxu0 0.0
  %266 = vmatpush1.msra.mxu0 0.0
  %267 = vmatprep.subr.mxu0 0.0
  %268 = vmatpush1.msra.mxu0 0.0
  %269 = vmatprep.subr.mxu0 0.0
  %270 = vmatpush1.msra.mxu0 0.0
  %271 = vmatprep.subr.mxu0 0.0
  %272 = vmatpush1.msra.mxu0 0.0
  %273 = vmatprep.subr.mxu0 0.0
  %274 = vmatpush1.msra.mxu0 0.0
  %275 = vmatprep.subr.mxu0 0.0
  %276 = vmatpush1.msra.mxu0 0.0
  %277 = vmatprep.mubr.f32.mxu0 0.0
  %278 = vmatmul.mubr.f32.gmra.mrb[0].mxu0 %v67
  %v279 = vpop.f32.mrb[0].mxu0
  %v280 = vadd.f32 0.0, %v279
  %v281 = vpop.f32.mrb[0].mxu0
  %282 = vmatprep.mubr.f32.mxu0 0.0
  %283 = vmatmul.mubr.f32.gmra.mrb[0].mxu0 %v70
  %v284 = vpop.f32.mrb[0].mxu0
  %v285 = vadd.f32 0.0, %v284
  %v286 = vpop.f32.mrb[0].mxu0
  %287 = vmatprep.mubr.f32.mxu0 0.0
  %288 = vmatmul.mubr.f32.gmra.mrb[0].mxu0 %v73
  %v289 = vpop.f32.mrb[0].mxu0
  %v290 = vadd.f32 0.0, %v289
  %v291 = vpop.f32.mrb[0].mxu0
  %292 = vmatprep.mubr.f32.mxu0 0.0
  %293 = vmatmul.mubr.f32.gmra.mrb[0].mxu0 %v76
  %v294 = vpop.f32.mrb[0].mxu0
  %v295 = vadd.f32 0.0, %v294
  %v296 = vpop.f32.mrb[0].mxu0
  %297 = vmatprep.mubr.f32.mxu0 0.0
  %298 = vmatmul.mubr.f32.gmra.mrb[0].mxu0 %v79
  %v299 = vpop.f32.mrb[0].mxu0
  %v300 = vadd.f32 0.0, %v299
  %v301 = vpop.f32.mrb[0].mxu0
  %302 = vmatprep.mubr.f32.mxu0 0.0
  %303 = vmatmul.mubr.f32.gmra.mrb[0].mxu0 %v82
  %v304 = vpop.f32.mrb[0].mxu0
  %v305 = vadd.f32 0.0, %v304
  %v306 = vpop.f32.mrb[0].mxu0
  %307 = vmatprep.mubr.f32.mxu0 0.0
  %308 = vmatmul.mubr.f32.gmra.mrb[0].mxu0 %v85
  %v309 = vpop.f32.mrb[0].mxu0
  %v310 = vadd.f32 0.0, %v309
  %v311 = vpop.f32.mrb[0].mxu0
  %312 = vmatprep.mubr.f32.mxu0 0.0
  %313 = vmatmul.mubr.f32.gmra.mrb[0].mxu0 %v88
  %v314 = vpop.f32.mrb[0].mxu0
  %v315 = vadd.f32 0.0, %v314
  %v316 = vpop.f32.mrb[0].mxu0
  %317 = vmatprep.mubr.f32.mxu0 0.0
  %318 = vmatmul.mubr.f32.gmra.mrb[0].mxu0 %v91
  %v319 = vpop.f32.mrb[0].mxu0
  %v320 = vadd.f32 0.0, %v319
  %v321 = vpop.f32.mrb[0].mxu0
  %322 = vmatprep.mubr.f32.mxu0 0.0
  %323 = vmatmul.mubr.f32.gmra.mrb[0].mxu0 %v94
  %v324 = vpop.f32.mrb[0].mxu0
  %v325 = vadd.f32 0.0, %v324
  %v326 = vpop.f32.mrb[0].mxu0
  %327 = vmatprep.mubr.f32.mxu0 0.0
  %328 = vmatmul.mubr.f32.gmra.mrb[0].mxu0 %v97
  %v329 = vpop.f32.mrb[0].mxu0
  %v330 = vadd.f32 0.0, %v329
  %v331 = vpop.f32.mrb[0].mxu0
  %332 = vmatprep.mubr.f32.mxu0 0.0
  %333 = vmatmul.mubr.f32.gmra.mrb[0].mxu0 %v100
  %v334 = vpop.f32.mrb[0].mxu0
  %v335 = vadd.f32 0.0, %v334
  %v336 = vpop.f32.mrb[0].mxu0
  %337 = vmatprep.mubr.f32.mxu0 0.0
  %338 = vmatmul.mubr.f32.gmra.mrb[0].mxu0 %v103
  %v339 = vpop.f32.mrb[0].mxu0
  %v340 = vadd.f32 0.0, %v339
  %v341 = vpop.f32.mrb[0].mxu0
  %342 = vmatprep.mubr.f32.mxu0 0.0
  %343 = vmatmul.mubr.f32.gmra.mrb[0].mxu0 %v106
  %v344 = vpop.f32.mrb[0].mxu0
  %v345 = vadd.f32 0.0, %v344
  %v346 = vpop.f32.mrb[0].mxu0
  %347 = vmatprep.mubr.f32.mxu0 0.0
  %348 = vmatmul.mubr.f32.gmra.mrb[0].mxu0 %v109
  %v349 = vpop.f32.mrb[0].mxu0
  %v350 = vadd.f32 0.0, %v349
  %v351 = vpop.f32.mrb[0].mxu0
  %352 = vmatprep.mubr.f32.mxu0 0.0
  %353 = vmatmul.mubr.f32.gmra.mrb[0].mxu0 %v112
  %v354 = vpop.f32.mrb[0].mxu0
  %v355 = vadd.f32 0.0, %v354
  %v356 = vpop.f32.mrb[0].mxu0
  %357 = vmatprep.mubr.f32.mxu0 0.0
  %358 = vmatmul.mubr.f32.gmra.mrb[0].mxu0 %v115
  %v359 = vpop.f32.mrb[0].mxu0
  %v360 = vadd.f32 0.0, %v359
  %v361 = vpop.f32.mrb[0].mxu0
  %362 = vmatprep.mubr.f32.mxu0 0.0
  %363 = vmatmul.mubr.f32.gmra.mrb[0].mxu0 %v118
  %v364 = vpop.f32.mrb[0].mxu0
  %v365 = vadd.f32 0.0, %v364
  %v366 = vpop.f32.mrb[0].mxu0
  %367 = vmatprep.mubr.f32.mxu0 0.0
  %368 = vmatmul.mubr.f32.gmra.mrb[0].mxu0 %v121
  %v369 = vpop.f32.mrb[0].mxu0
  %v370 = vadd.f32 0.0, %v369
  %v371 = vpop.f32.mrb[0].mxu0
  %372 = vmatprep.mubr.f32.mxu0 0.0
  %373 = vmatmul.mubr.f32.gmra.mrb[0].mxu0 %v124
  %v374 = vpop.f32.mrb[0].mxu0
  %v375 = vadd.f32 0.0, %v374
  %v376 = vpop.f32.mrb[0].mxu0
  %377 = vmatprep.mubr.f32.mxu0 0.0
  %378 = vmatmul.mubr.f32.gmra.mrb[0].mxu0 %v127
  %v379 = vpop.f32.mrb[0].mxu0
  %v380 = vadd.f32 0.0, %v379
  %v381 = vpop.f32.mrb[0].mxu0
  %382 = vmatprep.mubr.f32.mxu0 0.0
  %383 = vmatmul.mubr.f32.gmra.mrb[0].mxu0 %v130
  %v384 = vpop.f32.mrb[0].mxu0
  %v385 = vadd.f32 0.0, %v384
  %v386 = vpop.f32.mrb[0].mxu0
  %387 = vmatprep.mubr.f32.mxu0 0.0
  %388 = vmatmul.mubr.f32.gmra.mrb[0].mxu0 %v133
  %v389 = vpop.f32.mrb[0].mxu0
  %v390 = vadd.f32 0.0, %v389
  %v391 = vpop.f32.mrb[0].mxu0
  %392 = vmatprep.mubr.f32.mxu0 0.0
  %393 = vmatmul.mubr.f32.gmra.mrb[0].mxu0 %v136
  %v394 = vpop.f32.mrb[0].mxu0
  %v395 = vadd.f32 0.0, %v394
  %v396 = vpop.f32.mrb[0].mxu0
  %397 = vmatprep.mubr.f32.mxu0 0.0
  %398 = vmatmul.mubr.f32.gmra.mrb[0].mxu0 %v139
  %v399 = vpop.f32.mrb[0].mxu0
  %v400 = vadd.f32 0.0, %v399
  %v401 = vpop.f32.mrb[0].mxu0
  %402 = vmatprep.mubr.f32.mxu0 0.0
  %403 = vmatmul.mubr.f32.gmra.mrb[0].mxu0 %v142
  %v404 = vpop.f32.mrb[0].mxu0
  %v405 = vadd.f32 0.0, %v404
  %v406 = vpop.f32.mrb[0].mxu0
  %407 = vmatprep.mubr.f32.mxu0 0.0
  %408 = vmatmul.mubr.f32.gmra.mrb[0].mxu0 %v145
  %v409 = vpop.f32.mrb[0].mxu0
  %v410 = vadd.f32 0.0, %v409
  %v411 = vpop.f32.mrb[0].mxu0
  %412 = vmatprep.mubr.f32.mxu0 0.0
  %413 = vmatmul.mubr.f32.gmra.mrb[0].mxu0 %v148
  %v414 = vpop.f32.mrb[0].mxu0
  %v415 = vadd.f32 0.0, %v414
  %v416 = vpop.f32.mrb[0].mxu0
  %417 = vmatprep.mubr.f32.mxu0 0.0
  %418 = vmatmul.mubr.f32.gmra.mrb[0].mxu0 %v151
  %v419 = vpop.f32.mrb[0].mxu0
  %v420 = vadd.f32 0.0, %v419
  %v421 = vpop.f32.mrb[0].mxu0
  %422 = vmatprep.mubr.f32.mxu0 0.0
  %423 = vmatmul.mubr.f32.gmra.mrb[0].mxu0 %v154
  %v424 = vpop.f32.mrb[0].mxu0
  %v425 = vadd.f32 0.0, %v424
  %v426 = vpop.f32.mrb[0].mxu0
  %427 = vmatprep.mubr.f32.mxu0 0.0
  %428 = vmatmul.mubr.f32.gmra.mrb[0].mxu0 %v157
  %v429 = vpop.f32.mrb[0].mxu0
  %v430 = vadd.f32 0.0, %v429
  %v431 = vpop.f32.mrb[0].mxu0
  %432 = vmatprep.mubr.f32.mxu0 0.0
  %433 = vmatmul.mubr.f32.gmra.mrb[0].mxu0 %v160
  %v434 = vpop.f32.mrb[0].mxu0
  %v435 = vadd.f32 0.0, %v434
  %v436 = vpop.f32.mrb[0].mxu0
  %437 = vmatprep.mubr.f32.mxu0 0.0
  %438 = vmatmul.mubr.f32.gmra.mrb[0].mxu0 %v163
  %v439 = vpop.f32.mrb[0].mxu0
  %v440 = vadd.f32 0.0, %v439
  %v441 = vpop.f32.mrb[0].mxu0
  %442 = vmatprep.mubr.f32.mxu0 0.0
  %443 = vmatmul.mubr.f32.gmra.mrb[0].mxu0 %v166
  %v444 = vpop.f32.mrb[0].mxu0
  %v445 = vadd.f32 0.0, %v444
  %v446 = vpop.f32.mrb[0].mxu0
  %447 = vmatprep.mubr.f32.mxu0 0.0
  %448 = vmatmul.mubr.f32.gmra.mrb[0].mxu0 %v169
  %v449 = vpop.f32.mrb[0].mxu0
  %v450 = vadd.f32 0.0, %v449
  %v451 = vpop.f32.mrb[0].mxu0
  %452 = vmatprep.mubr.f32.mxu0 0.0
  %453 = vmatmul.mubr.f32.gmra.mrb[0].mxu0 %v172
  %v454 = vpop.f32.mrb[0].mxu0
  %v455 = vadd.f32 0.0, %v454
  %v456 = vpop.f32.mrb[0].mxu0
  %457 = vmatprep.mubr.f32.mxu0 0.0
  %458 = vmatmul.mubr.f32.gmra.mrb[0].mxu0 %v175
  %v459 = vpop.f32.mrb[0].mxu0
  %v460 = vadd.f32 0.0, %v459
  %v461 = vpop.f32.mrb[0].mxu0
  %462 = vmatprep.mubr.f32.mxu0 0.0
  %463 = vmatmul.mubr.f32.gmra.mrb[0].mxu0 %v178
  %v464 = vpop.f32.mrb[0].mxu0
  %v465 = vadd.f32 0.0, %v464
  %v466 = vpop.f32.mrb[0].mxu0
  %467 = vmatprep.mubr.f32.mxu0 0.0
  %468 = vmatmul.mubr.f32.gmra.mrb[0].mxu0 %v181
  %v469 = vpop.f32.mrb[0].mxu0
  %v470 = vadd.f32 0.0, %v469
  %v471 = vpop.f32.mrb[0].mxu0
  %472 = vmatprep.mubr.f32.mxu0 0.0
  %473 = vmatmul.mubr.f32.gmra.mrb[0].mxu0 %v184
  %v474 = vpop.f32.mrb[0].mxu0
  %v475 = vadd.f32 0.0, %v474
  %v476 = vpop.f32.mrb[0].mxu0
  %477 = vmatprep.mubr.f32.mxu0 0.0
  %478 = vmatmul.mubr.f32.gmra.mrb[0].mxu0 %v187
  %v479 = vpop.f32.mrb[0].mxu0
  %v480 = vadd.f32 0.0, %v479
  %v481 = vpop.f32.mrb[0].mxu0
  %482 = vmatprep.mubr.f32.mxu0 0.0
  %483 = vmatmul.mubr.f32.gmra.mrb[0].mxu0 %v190
  %v484 = vpop.f32.mrb[0].mxu0
  %v485 = vadd.f32 0.0, %v484
  %v486 = vpop.f32.mrb[0].mxu0
  %487 = vmatprep.mubr.f32.mxu0 0.0
  %488 = vmatmul.mubr.f32.gmra.mrb[0].mxu0 %v193
  %v489 = vpop.f32.mrb[0].mxu0
  %v490 = vadd.f32 0.0, %v489
  %v491 = vpop.f32.mrb[0].mxu0
  %492 = vmatprep.mubr.f32.mxu0 0.0
  %493 = vmatmul.mubr.f32.gmra.mrb[0].mxu0 %v196
  %v494 = vpop.f32.mrb[0].mxu0
  %v495 = vadd.f32 0.0, %v494
  %v496 = vpop.f32.mrb[0].mxu0
  %497 = vmatprep.mubr.f32.mxu0 0.0
  %498 = vmatmul.mubr.f32.gmra.mrb[0].mxu0 %v199
  %v499 = vpop.f32.mrb[0].mxu0
  %v500 = vadd.f32 0.0, %v499
  %v501 = vpop.f32.mrb[0].mxu0
  %502 = vmatprep.mubr.f32.mxu0 0.0
  %503 = vmatmul.mubr.f32.gmra.mrb[0].mxu0 %v202
  %v504 = vpop.f32.mrb[0].mxu0
  %v505 = vadd.f32 0.0, %v504
  %v506 = vpop.f32.mrb[0].mxu0
  %507 = vmatprep.mubr.f32.mxu0 0.0
  %508 = vmatmul.mubr.f32.gmra.mrb[0].mxu0 %v205
  %v509 = vpop.f32.mrb[0].mxu0
  %v510 = vadd.f32 0.0, %v509
  %v511 = vpop.f32.mrb[0].mxu0
  %512 = vmatprep.mubr.f32.mxu0 0.0
  %513 = vmatmul.mubr.f32.gmra.mrb[0].mxu0 %v208
  %v514 = vpop.f32.mrb[0].mxu0
  %v515 = vadd.f32 0.0, %v514
  %v516 = vpop.f32.mrb[0].mxu0
  %517 = vmatprep.mubr.f32.mxu0 0.0
  %518 = vmatmul.mubr.f32.gmra.mrb[0].mxu0 %v211
  %v519 = vpop.f32.mrb[0].mxu0
  %v520 = vadd.f32 0.0, %v519
  %v521 = vpop.f32.mrb[0].mxu0
  %522 = vdwg.mxu0
  %523 = vst [vmem:[%s2] sm:$0xff] %v280
  %524 = vst [vmem:[%s2 + $0x8] sm:$0xff] %v285
  %525 = vst [vmem:[%s2 + $0x10] sm:$0xff] %v290
  %526 = vst [vmem:[%s2 + $0x18] sm:$0xff] %v295
  %527 = vst [vmem:[%s2 + $0x20] sm:$0xff] %v300
  %528 = vst [vmem:[%s2 + $0x28] sm:$0xff] %v305
  %529 = vst [vmem:[%s2 + $0x30] sm:$0xff] %v310
  %530 = vst [vmem:[%s2 + $0x38] sm:$0xff] %v315
  %531 = vst [vmem:[%s2 + $0x40] sm:$0xff] %v320
  %532 = vst [vmem:[%s2 + $0x48] sm:$0xff] %v325
  %533 = vst [vmem:[%s2 + $0x50] sm:$0xff] %v330
  %534 = vst [vmem:[%s2 + $0x58] sm:$0xff] %v335
  %535 = vst [vmem:[%s2 + $0x60] sm:$0xff] %v340
  %536 = vst [vmem:[%s2 + $0x68] sm:$0xff] %v345
  %537 = vst [vmem:[%s2 + $0x70] sm:$0xff] %v350
  %538 = vst [vmem:[%s2 + $0x78] sm:$0xff] %v355
  %539 = vst [vmem:[%s2 + $0x80] sm:$0xff] %v360
  %540 = vst [vmem:[%s2 + $0x88] sm:$0xff] %v365
  %541 = vst [vmem:[%s2 + $0x90] sm:$0xff] %v370
  %542 = vst [vmem:[%s2 + $0x98] sm:$0xff] %v375
  %543 = vst [vmem:[%s2 + $0xa0] sm:$0xff] %v380
  %544 = vst [vmem:[%s2 + $0xa8] sm:$0xff] %v385
  %545 = vst [vmem:[%s2 + $0xb0] sm:$0xff] %v390
  %546 = vst [vmem:[%s2 + $0xb8] sm:$0xff] %v395
  %547 = vst [vmem:[%s2 + $0xc0] sm:$0xff] %v400
  %548 = vst [vmem:[%s2 + $0xc8] sm:$0xff] %v405
  %549 = vst [vmem:[%s2 + $0xd0] sm:$0xff] %v410
  %550 = vst [vmem:[%s2 + $0xd8] sm:$0xff] %v415
  %551 = vst [vmem:[%s2 + $0xe0] sm:$0xff] %v420
  %552 = vst [vmem:[%s2 + $0xe8] sm:$0xff] %v425
  %553 = vst [vmem:[%s2 + $0xf0] sm:$0xff] %v430
  %554 = vst [vmem:[%s2 + $0xf8] sm:$0xff] %v435
  %555 = vst [vmem:[%s2 + $0x100] sm:$0xff] %v440
  %556 = vst [vmem:[%s2 + $0x108] sm:$0xff] %v445
  %557 = vst [vmem:[%s2 + $0x110] sm:$0xff] %v450
  %558 = vst [vmem:[%s2 + $0x118] sm:$0xff] %v455
  %559 = vst [vmem:[%s2 + $0x120] sm:$0xff] %v460
  %560 = vst [vmem:[%s2 + $0x128] sm:$0xff] %v465
  %561 = vst [vmem:[%s2 + $0x130] sm:$0xff] %v470
  %562 = vst [vmem:[%s2 + $0x138] sm:$0xff] %v475
  %563 = vst [vmem:[%s2 + $0x140] sm:$0xff] %v480
  %564 = vst [vmem:[%s2 + $0x148] sm:$0xff] %v485
  %565 = vst [vmem:[%s2 + $0x150] sm:$0xff] %v490
  %566 = vst [vmem:[%s2 + $0x158] sm:$0xff] %v495
  %567 = vst [vmem:[%s2 + $0x160] sm:$0xff] %v500
  %568 = vst [vmem:[%s2 + $0x168] sm:$0xff] %v505
  %569 = vst [vmem:[%s2 + $0x170] sm:$0xff] %v510
  %570 = vst [vmem:[%s2 + $0x178] sm:$0xff] %v515
  %571 = vst [vmem:[%s2 + $0x180] sm:$0xff] %v520
  // Predicated region
  $region10: #{conv2d_pallas.1} parent=0 // pred_check
    _
  $region11: #{conv2d_pallas.1} parent=0 // pred_check_branch
    %573 = sbr.rel (0) target = $region13
  $region12: #{conv2d_pallas.1} parent=0 // pred_region
    _
  $region13: #{conv2d_pallas.1} parent=0 // pred_fallthru
    _
  // Predicated region
  $region14: #{conv2d_pallas.1} parent=0 // pred_check
    _
  $region15: #{conv2d_pallas.1} parent=0 // pred_check_branch
    %575 = sbr.rel (0) target = $region17
  $region16: #{conv2d_pallas.1} parent=0 // pred_region
    _
  $region17: #{conv2d_pallas.1} parent=0 // pred_fallthru
    _

</llo_original>
